<compile_context>
chip_gen: v7x
topology: tpu7x:2x2x1
jax: 0.10.0
libtpu: 0.0.40
codegen_flags: <defaults>
</compile_context>

<pallas_src>
import jax
import jax.numpy as jnp
from jax.experimental import pallas as pl
from jax.experimental.pallas import tpu as pltpu


def _reassemble_kernel(x_ref, o_ref):
    # x_ref: (f*f, tc,  W,   H )  -- the f*f images of one output group.
    # o_ref: (1,   tc, f*W, f*H)  -- that whole output group.
    _, _, w, h = x_ref.shape
    f = o_ref.shape[2] // w
    # f*f static sub-tile stores: bounded live ranges, no full-band concat.
    for i in range(f):
        for j in range(f):
            o_ref[0, :, i * w:(i + 1) * w, j * h:(j + 1) * h] = x_ref[i * f + j]


def _round_up(a, m):
    return ((a + m - 1) // m) * m


def _sublane_pack(dtype):
    isz = jnp.dtype(dtype).itemsize
    if isz >= 4:
        return 8
    if isz == 2:
        return 16
    return 32


def _vmem_capacity_bytes():
    # Conservative fallback = v7x per-TensorCore VMEM (the smallest part).
    cap = 64 * 1024 * 1024
    try:
        cap = int(pltpu.get_tpu_info().vmem_capacity_bytes)
    except Exception:
        pass
    return cap


def _channel_tile(c, w, h, f, dtype, budget_bytes):
    """Largest channel chunk whose double-buffered, *padded* VMEM footprint
    fits the budget.

    Per grid step Pallas double-buffers one input block (f*f, tc, W, H) and
    one output block (1, tc, f*W, f*H).  In VMEM the last dim is padded to 128
    lanes and the second-minor to the dtype sublane packing, so we budget on
    padded bytes (unpadded estimates can be ~8x too small for H=16 f32).
    """
    isz = jnp.dtype(dtype).itemsize
    sub = _sublane_pack(dtype)
    in_per_c = f * f * _round_up(w, sub) * _round_up(h, 128) * isz
    out_per_c = _round_up(f * w, sub) * _round_up(f * h, 128) * isz
    per_c = 2 * (in_per_c + out_per_c)          # x2 for double buffering
    cap = max(1, budget_bytes // per_c)
    return int(min(c, cap))


def reassemble_pallas(x, f=2):
    """x: (B, C, W, H) with B % f**2 == 0 -> (B // f**2, C, f*W, f*H)."""
    b, c, w, h = x.shape
    assert b % (f * f) == 0, "batch must be divisible by f**2"
    n = b // (f * f)

    vmem_cap = _vmem_capacity_bytes()
    # ~40% of VMEM for the pipelined blocks; scoped limit at ~90%.
    tc = _channel_tile(c, w, h, f, x.dtype, budget_bytes=(2 * vmem_cap) // 5)
    nc = (c + tc - 1) // tc

    # Lead with the larger parallel axis so it shards across TensorCores
    # (matters on v7x's 2-TC megacore; a no-op on v5e/v6e).
    n_first = n >= nc
    grid = (n, nc) if n_first else (nc, n)

    def _ni_ci(g0, g1):
        return (g0, g1) if n_first else (g1, g0)

    in_spec = pl.BlockSpec(
        (f * f, tc, w, h),
        lambda g0, g1: _ni_ci(g0, g1) + (0, 0),
    )
    out_spec = pl.BlockSpec(
        (1, tc, f * w, f * h),
        lambda g0, g1: _ni_ci(g0, g1) + (0, 0),
    )

    return pl.pallas_call(
        _reassemble_kernel,
        out_shape=jax.ShapeDtypeStruct((n, c, f * w, f * h), x.dtype),
        grid=grid,
        in_specs=[in_spec],
        out_specs=out_spec,
        compiler_params=pltpu.CompilerParams(
            dimension_semantics=("parallel", "parallel"),
            vmem_limit_bytes=(vmem_cap * 9) // 10,
        ),
        # NOTE: if profiling ever shows the input DMA exposed, add
        # pipeline_mode=pl.Buffered(3) on in_spec (costs VMEM; sweep first).
        cost_estimate=pl.CostEstimate(
            flops=0,
            transcendentals=0,
            bytes_accessed=2 * x.size * jnp.dtype(x.dtype).itemsize),
    )(x)


class ReassemblePallas:
    """JAX/Pallas equivalent of the PyTorch Reassemble module (no parameters)."""

    def __init__(self, factor=2):
        self.f = factor

    def __call__(self, x):
        # compress()
        xs = None
        if x.ndim == 5:
            xs = x.shape
            x = x.reshape(xs[0], xs[1] * xs[2], xs[3], xs[4])
        # reassemble() -- the hot path, done in the Pallas kernel
        y = reassemble_pallas(x, self.f)
        # recover()
        if xs is not None:
            y = y.reshape(-1, xs[1], xs[2], y.shape[-2], y.shape[-1])
        return y


def _reassemble_ref(x, f=2):
    """Pure-JAX reference mirroring the PyTorch view/permute/fold path."""
    b, c, w, h = x.shape
    x = x.reshape(b // (f * f), f, f, c, w, h)
    x = x.transpose(0, 3, 1, 4, 2, 5)          # (n, c, f, w, f, h)
    return x.reshape(b // (f * f), c, f * w, f * h)


if __name__ == "__main__":
    mod = ReassemblePallas(factor=2)

    # 4D case: batch=8 (divisible by f**2=4), channels=4, spatial 16x16.
    x4 = jax.random.normal(jax.random.PRNGKey(0), (8, 4, 16, 16), jnp.float32)
    y4 = jax.block_until_ready(mod(x4))
    assert y4.shape == (2, 4, 32, 32), y4.shape
    assert jnp.array_equal(y4, _reassemble_ref(x4, 2)), "4D mismatch"

    # 5D case: (b, c1, c2, w, h) exercised through compress/recover glue.
    x5 = jax.random.normal(jax.random.PRNGKey(1), (8, 2, 3, 16, 16),
                           dtype=jnp.float32)
    y5 = jax.block_until_ready(mod(x5))
    ref5 = _reassemble_ref(x5.reshape(8, 6, 16, 16), 2).reshape(2, 2, 3, 32, 32)
    assert y5.shape == (2, 2, 3, 32, 32), y5.shape
    assert jnp.array_equal(y5, ref5), "5D mismatch"

    # Spatial dims that are not multiples of 8: now allowed because both
    # blocks' trailing dims equal the full array dims.
    x6 = jax.random.normal(jax.random.PRNGKey(2), (4, 3, 12, 16), jnp.float32)
    y6 = jax.block_until_ready(mod(x6))
    assert y6.shape == (1, 3, 24, 32), y6.shape
    assert jnp.array_equal(y6, _reassemble_ref(x6, 2)), "odd-shape mismatch"

    print("KERNEL_OK")
</pallas_src>

<mosaic_0001>
module attributes {stable_mosaic.version = 11 : i64} {
  func.func @_reassemble_kernel(%arg0: i32, %arg1: i32, %arg2: memref<4x4x16x16xf32, #tpu.memory_space<vmem>>, %arg3: memref<1x4x32x32xf32, #tpu.memory_space<vmem>>) attributes {dimension_semantics = [#tpu.dimension_semantics<parallel>, #tpu.dimension_semantics<parallel>], iteration_bounds = array<i64: 2, 1>, scalar_prefetch = 0 : i64, scratch_operands = 0 : i64, tpu.core_type = #tpu.core_type<tc>, window_params = [{transform_indices = @transform_0, window_bounds = array<i64: 4, 4, 16, 16>}, {transform_indices = @transform_1, window_bounds = array<i64: 1, 4, 32, 32>}]} {
    %c0 = arith.constant 0 : index
    %c0_0 = arith.constant 0 : index
    %c0_1 = arith.constant 0 : index
    %c0_2 = arith.constant 0 : index
    %0 = vector.load %arg2[%c0, %c0_0, %c0_1, %c0_2] : memref<4x4x16x16xf32, #tpu.memory_space<vmem>>, vector<1x4x16x16xf32>
    %1 = vector.shape_cast %0 : vector<1x4x16x16xf32> to vector<4x16x16xf32>
    %c0_3 = arith.constant 0 : index
    %c0_4 = arith.constant 0 : index
    %c0_5 = arith.constant 0 : index
    %c0_6 = arith.constant 0 : index
    %2 = vector.load %arg3[%c0_3, %c0_4, %c0_5, %c0_6] : memref<1x4x32x32xf32, #tpu.memory_space<vmem>>, vector<1x4x16x16xf32>
    %3 = vector.shape_cast %2 : vector<1x4x16x16xf32> to vector<4x16x16xf32>
    %4 = vector.shape_cast %1 : vector<4x16x16xf32> to vector<1x4x16x16xf32>
    tpu.vector_store %arg3[%c0_3, %c0_4, %c0_5, %c0_6], %4 {strides = array<i32>} : memref<1x4x32x32xf32, #tpu.memory_space<vmem>>, vector<1x4x16x16xf32>,
    %c1 = arith.constant 1 : index
    %c0_7 = arith.constant 0 : index
    %c0_8 = arith.constant 0 : index
    %c0_9 = arith.constant 0 : index
    %5 = vector.load %arg2[%c1, %c0_7, %c0_8, %c0_9] : memref<4x4x16x16xf32, #tpu.memory_space<vmem>>, vector<1x4x16x16xf32>
    %6 = vector.shape_cast %5 : vector<1x4x16x16xf32> to vector<4x16x16xf32>
    %c0_10 = arith.constant 0 : index
    %c0_11 = arith.constant 0 : index
    %c0_12 = arith.constant 0 : index
    %c16 = arith.constant 16 : index
    %7 = vector.load %arg3[%c0_10, %c0_11, %c0_12, %c16] : memref<1x4x32x32xf32, #tpu.memory_space<vmem>>, vector<1x4x16x16xf32>
    %8 = vector.shape_cast %7 : vector<1x4x16x16xf32> to vector<4x16x16xf32>
    %9 = vector.shape_cast %6 : vector<4x16x16xf32> to vector<1x4x16x16xf32>
    tpu.vector_store %arg3[%c0_10, %c0_11, %c0_12, %c16], %9 {strides = array<i32>} : memref<1x4x32x32xf32, #tpu.memory_space<vmem>>, vector<1x4x16x16xf32>,
    %c2 = arith.constant 2 : index
    %c0_13 = arith.constant 0 : index
    %c0_14 = arith.constant 0 : index
    %c0_15 = arith.constant 0 : index
    %10 = vector.load %arg2[%c2, %c0_13, %c0_14, %c0_15] : memref<4x4x16x16xf32, #tpu.memory_space<vmem>>, vector<1x4x16x16xf32>
    %11 = vector.shape_cast %10 : vector<1x4x16x16xf32> to vector<4x16x16xf32>
    %c0_16 = arith.constant 0 : index
    %c0_17 = arith.constant 0 : index
    %c16_18 = arith.constant 16 : index
    %c0_19 = arith.constant 0 : index
    %12 = vector.load %arg3[%c0_16, %c0_17, %c16_18, %c0_19] : memref<1x4x32x32xf32, #tpu.memory_space<vmem>>, vector<1x4x16x16xf32>
    %13 = vector.shape_cast %12 : vector<1x4x16x16xf32> to vector<4x16x16xf32>
    %14 = vector.shape_cast %11 : vector<4x16x16xf32> to vector<1x4x16x16xf32>
    tpu.vector_store %arg3[%c0_16, %c0_17, %c16_18, %c0_19], %14 {strides = array<i32>} : memref<1x4x32x32xf32, #tpu.memory_space<vmem>>, vector<1x4x16x16xf32>,
    %c3 = arith.constant 3 : index
    %c0_20 = arith.constant 0 : index
    %c0_21 = arith.constant 0 : index
    %c0_22 = arith.constant 0 : index
    %15 = vector.load %arg2[%c3, %c0_20, %c0_21, %c0_22] : memref<4x4x16x16xf32, #tpu.memory_space<vmem>>, vector<1x4x16x16xf32>
    %16 = vector.shape_cast %15 : vector<1x4x16x16xf32> to vector<4x16x16xf32>
    %c0_23 = arith.constant 0 : index
    %c0_24 = arith.constant 0 : index
    %c16_25 = arith.constant 16 : index
    %c16_26 = arith.constant 16 : index
    %17 = vector.load %arg3[%c0_23, %c0_24, %c16_25, %c16_26] : memref<1x4x32x32xf32, #tpu.memory_space<vmem>>, vector<1x4x16x16xf32>
    %18 = vector.shape_cast %17 : vector<1x4x16x16xf32> to vector<4x16x16xf32>
    %19 = vector.shape_cast %16 : vector<4x16x16xf32> to vector<1x4x16x16xf32>
    tpu.vector_store %arg3[%c0_23, %c0_24, %c16_25, %c16_26], %19 {strides = array<i32>} : memref<1x4x32x32xf32, #tpu.memory_space<vmem>>, vector<1x4x16x16xf32>,
    return
  }
  func.func @transform_0(%arg0: i32, %arg1: i32) -> (i32, i32, i32, i32) {
    %c0_i32 = arith.constant 0 : i32
    %c0_i32_0 = arith.constant 0 : i32
    %c0_i32_1 = arith.constant 0 : i32
    return %arg0, %arg1, %c0_i32, %c0_i32_0 : i32, i32, i32, i32
  }
  func.func @transform_1(%arg0: i32, %arg1: i32) -> (i32, i32, i32, i32) {
    %c0_i32 = arith.constant 0 : i32
    %c0_i32_0 = arith.constant 0 : i32
    %c0_i32_1 = arith.constant 0 : i32
    return %arg0, %arg1, %c0_i32, %c0_i32_0 : i32, i32, i32, i32
  }
}

</mosaic_0001>

<llo_original>
// kernel: tpu_custom_call.1
$region0: #{tpu_custom_call.1}
  #allocation0 [shape = 'u32[]', space=smem, size = 0x4, offset = 0x4, fixed_abs, tag = 'smem constant byte address 0x4 - core index']
  #allocation1 [shape = 'u32[144,128]{1,0:T(1,128)}', space=vmem, size = 0x12000, scoped, tag = 'internal scratch']
  %s0 = inlined_call_operand.hbm [shape: f32[8,4,16,16], index: 0, kind: input, shape index: {}]
  %s1 = inlined_call_operand.hbm [shape: f32[2,4,32,32], index: 1, kind: output, shape index: {}]
  %s2 = sld [smem:[#allocation0]]
  $region41: #{tpu_custom_call.1} parent=0
    _
  %s4 = ssub.s32 1, %s2
  %s5 = scalar_select 0, %s4, %s2
  $region1: #{tpu_custom_call.1} parent=0
    #allocation2 [shape = 'u8[262144]{0}', space=vmem, size = 0x40000, scoped, tag = 'input window, operand 0']
    #allocation3 [shape = 's32[2]{0}', space=sflag, size = 0x8, scoped, tag = 'scoped memory for tpu_custom_call.1']
    #allocation4 [shape = 's32[2]{0}', space=sflag, size = 0x8, scoped, tag = 'scoped memory for tpu_custom_call.1']
    #allocation5 [shape = 'u8[131072]{0}', space=vmem, size = 0x20000, scoped, tag = 'output window, operand 0']
    %6 = vsyncpa [#allocation3], 0
    %s7 = scalar_lea.sflag [#allocation3], 1
    %8 = vsyncpa %s7, 0
    %9 = vsyncpa [#allocation4], 0
    %s10 = scalar_lea.sflag [#allocation4], 1
    %11 = vsyncpa %s10, 0
    loop: start=0, step=1, limit=4
    $region2: #{tpu_custom_call.1} parent=1 // loop_pre_header
      _
    $region3: #{tpu_custom_call.1} parent=1 // loop_header
      %s13 = sphi 0, %s17
      %p14 = scmp.ge.s32.totalorder %s13, 4
      %s20 = sphi 0, %s32
      %s21 = sphi 0, %s28
      %s22 = sphi 0, %s20
      %s23 = sphi 0, %s21
      %s24 = sphi 0, %s22
      %s25 = sphi 0, %s23
      %s37 = sphi 0, %s39
      %s40 = sphi 0, %s37
      %s41 = sphi 0, %s40
      %s57 = sphi 0, %s41
      %s65 = sphi 0, %s67
      %s68 = sphi 0, %s65
      %s69 = sphi 0, %s68
      %s85 = sphi 0, %s69
    $region4: #{tpu_custom_call.1} parent=1 // loop_header_branch
      %16 = sbr.rel (%p14) target = $region8
    $region5: #{tpu_custom_call.1} parent=1 // loop_body
      %s18 = ssub.s32 %s13, 1
      %s19 = ssub.s32 %s13, 2
      %s26 = sadd.s32 1, %s21
      %p27 = scmp.ge.s32.totalorder %s26, 1
      %s28 = scalar_select %p27, 0, %s26
      %s29 = sadd.s32 1, %s20
      %s30 = scalar_select %p27, %s29, %s20
      %p31 = scmp.ge.s32.totalorder %s30, 2
      %s32 = scalar_select %p31, 0, %s30
      %s33 = ssub.s32 %s20, %s32
      %s34 = ssub.s32 %s21, %s28
      %s35 = sor.u32 %s33, %s34
      %p36 = scmp.eq.s32.totalorder %s35, 0
      %s38 = sadd.s32 %s37, 1
      %s39 = scalar_select %p36, %s37, %s38
      %p42 = pneg %p36
      %p43 = scmp.eq.s32.totalorder %s13, 1
      %p44 = por %p42, %p43
      %p45 = scmp.ne.s32.totalorder %s37, %s40
      %p46 = scmp.eq.s32.totalorder %s13, 0
      %p47 = por %p45, %p46
      %p48 = scmp.ne.s32.totalorder %s37, %s40
      %p49 = scmp.eq.s32.totalorder %s18, 1
      %p50 = por %p48, %p49
      %p51 = scmp.ne.s32.totalorder %s40, %s41
      %p52 = scmp.eq.s32.totalorder %s18, 0
      %p53 = por %p51, %p52
      %p54 = scmp.ne.s32.totalorder %s40, %s41
      %p55 = scmp.eq.s32.totalorder %s19, 1
      %p56 = por %p54, %p55
      %p58 = scmp.ne.s32.totalorder %s41, %s57
      %p59 = scmp.eq.s32.totalorder %s19, 0
      %p60 = por %p58, %p59
      %s61 = ssub.s32 %s20, %s32
      %s62 = ssub.s32 %s21, %s28
      %s63 = sor.u32 %s61, %s62
      %p64 = scmp.eq.s32.totalorder %s63, 0
      %s66 = sadd.s32 %s65, 1
      %s67 = scalar_select %p64, %s65, %s66
      %p70 = pneg %p64
      %p71 = scmp.eq.s32.totalorder %s13, 1
      %p72 = por %p70, %p71
      %p73 = scmp.ne.s32.totalorder %s65, %s68
      %p74 = scmp.eq.s32.totalorder %s13, 0
      %p75 = por %p73, %p74
      %p76 = scmp.ne.s32.totalorder %s65, %s68
      %p77 = scmp.eq.s32.totalorder %s18, 1
      %p78 = por %p76, %p77
      %p79 = scmp.ne.s32.totalorder %s68, %s69
      %p80 = scmp.eq.s32.totalorder %s18, 0
      %p81 = por %p79, %p80
      %p82 = scmp.ne.s32.totalorder %s68, %s69
      %p83 = scmp.eq.s32.totalorder %s19, 1
      %p84 = por %p82, %p83
      %p86 = scmp.ne.s32.totalorder %s69, %s85
      %p87 = scmp.eq.s32.totalorder %s19, 0
      %p88 = por %p86, %p87
      %p89 = scmp.le.s32.totalorder 1, %s13
      %p90 = scmp.lt.s32.totalorder %s13, 3
      %p91 = pnand %p89, %p90
      %p92 = pneg %p91
      // Predicated region
      $region9: #{tpu_custom_call.1} parent=5 // pred_check
        _
      $region10: #{tpu_custom_call.1} parent=5 // pred_check_branch
        %94 = sbr.rel (%p91) target = $region12
      $region11: #{tpu_custom_call.1} parent=5 // pred_region
        %s95 = ssub.s32 %s13, 1
      $region12: #{tpu_custom_call.1} parent=5 // pred_fallthru
        _
      %p96 = scmp.lt.s32.totalorder %s13, 2
      // Predicated region
      $region13: #{tpu_custom_call.1} parent=5 // pred_check
        %p97 = pneg %p96
      $region14: #{tpu_custom_call.1} parent=5 // pred_check_branch
        %99 = sbr.rel (%p97) target = $region16
      $region15: #{tpu_custom_call.1} parent=5 // pred_region
        // Predicated region
        $region17: #{tpu_custom_call.1} parent=15 // pred_check
          %p100 = pneg %p47
        $region18: #{tpu_custom_call.1} parent=15 // pred_check_branch
          %102 = sbr.rel (%p100) target = $region20
        $region19: #{tpu_custom_call.1} parent=15 // pred_region
          %s103 = sand.u32 %s37, 1
          %s104 = scalar_lea.sflag [#allocation3], %s103
          %s105 = sand.u32 %s37, 1
          %s106 = smul.addr %s105, 256
          %s107 = scalar_lea.vmem [#allocation2], %s106
          %s108 = smul.u32 4, %s20
          %s109 = smul.u32 4, %s21
          %s111 = ssub.s32 4096, 4096
          %112 = vsyncadd %s104, %s111
          %s113 = smul.addr %s109, 2
          %s114 = smul.addr %s108, 8
          %s115 = sadd.s32 %s113, %s114
          %s116 = smul.addr %s115, 128
          %s117 = scalar_lea.hbm %s0, %s116
          %s118 = sshll.u32 %s107, 4
          %s119 = int_to_ptr.vmem [resolvable:$true] %s118
          %124 = dma.hbm_to_vmem [thread:$0]  %s117, 4096, %s119, %s104, 128, 128, 8
        $region20: #{tpu_custom_call.1} parent=15 // pred_fallthru
          _
      $region16: #{tpu_custom_call.1} parent=5 // pred_fallthru
        _
      %p125 = scmp.le.s32.totalorder 1, %s13
      %p126 = scmp.lt.s32.totalorder %s13, 3
      %p127 = pnand %p125, %p126
      %p128 = pneg %p127
      // Predicated region
      $region21: #{tpu_custom_call.1} parent=5 // pred_check
        _
      $region22: #{tpu_custom_call.1} parent=5 // pred_check_branch
        %130 = sbr.rel (%p127) target = $region24
      $region23: #{tpu_custom_call.1} parent=5 // pred_region
        %s131 = ssub.s32 %s13, 1
        %s132 = sand.u32 %s40, 1
        %s133 = scalar_lea.sflag [#allocation3], %s132
        %s134 = sand.u32 %s40, 1
        %s135 = smul.addr %s134, 256
        %s136 = scalar_lea.vmem [#allocation2], %s135
        // Predicated region
        $region25: #{tpu_custom_call.1} parent=23 // pred_check
          %p137 = pneg %p53
        $region26: #{tpu_custom_call.1} parent=23 // pred_check_branch
          %139 = sbr.rel (%p137) target = $region28
        $region27: #{tpu_custom_call.1} parent=23 // pred_region
          %140 = dma.done %s133, 4096
        $region28: #{tpu_custom_call.1} parent=23 // pred_fallthru
          _
        %s141 = sand.u32 %s40, 1
        %s142 = scalar_lea.sflag [#allocation3], %s141
        %s143 = sand.u32 %s40, 1
        %s144 = smul.addr %s143, 256
        %s145 = scalar_lea.vmem [#allocation2], %s144
        %p146 = pneg %p53
        %p147 = pneg %p50
        %p148 = pneg %p81
        %p149 = pneg %p78
        %s150 = sand.u32 %s68, 1
        %s151 = scalar_lea.sflag [#allocation4], %s150
        %s152 = sand.u32 %s68, 1
        %s153 = smul.addr %s152, 128
        %s154 = scalar_lea.vmem [#allocation5], %s153
        %s155 = smul.u32 4, %s22
        %s156 = smul.u32 4, %s23
        %s157 = smul.u32 4, %s23
        %v158 = vld [vmem:[%s136] sm:$0xff]
        %v159 = vld [vmem:[%s136 + $0x8] sm:$0xff]
        %v160 = vld [vmem:[%s136 + $0x10] sm:$0xff]
        %v161 = vld [vmem:[%s136 + $0x18] sm:$0xff]
        %v162 = vld [vmem:[%s136 + $0x20] sm:$0xff]
        %v163 = vld [vmem:[%s136 + $0x28] sm:$0xff]
        %v164 = vld [vmem:[%s136 + $0x30] sm:$0xff]
        %v165 = vld [vmem:[%s136 + $0x38] sm:$0xff]
        %vm166 = vcmask 130048
        %167 = vst.msk [vmem:[%s154] sm:$0xff] %vm166, %v158
        %168 = vst.msk [vmem:[%s154 + $0x8] sm:$0xff] %vm166, %v159
        %169 = vst.msk [vmem:[%s154 + $0x20] sm:$0xff] %vm166, %v160
        %170 = vst.msk [vmem:[%s154 + $0x28] sm:$0xff] %vm166, %v161
        %171 = vst.msk [vmem:[%s154 + $0x40] sm:$0xff] %vm166, %v162
        %172 = vst.msk [vmem:[%s154 + $0x48] sm:$0xff] %vm166, %v163
        %173 = vst.msk [vmem:[%s154 + $0x60] sm:$0xff] %vm166, %v164
        %174 = vst.msk [vmem:[%s154 + $0x68] sm:$0xff] %vm166, %v165
        %s175 = scalar_lea.vmem %s136, 64 [#allocation2]
        %v176 = vld [vmem:[%s175] sm:$0xff]
        %v177 = vld [vmem:[%s175 + $0x8] sm:$0xff]
        %v178 = vld [vmem:[%s175 + $0x10] sm:$0xff]
        %v179 = vld [vmem:[%s175 + $0x18] sm:$0xff]
        %v180 = vld [vmem:[%s175 + $0x20] sm:$0xff]
        %v181 = vld [vmem:[%s175 + $0x28] sm:$0xff]
        %v182 = vld [vmem:[%s175 + $0x30] sm:$0xff]
        %v183 = vld [vmem:[%s175 + $0x38] sm:$0xff]
        %192 = vrot.lane.b32.xlu0 %v176, 16
        %v193 = vpop.permute.xlu0 %192
        %194 = vrot.lane.b32.xlu0 %v177, 16
        %v195 = vpop.permute.xlu0 %194
        %196 = vrot.lane.b32.xlu0 %v178, 16
        %v197 = vpop.permute.xlu0 %196
        %198 = vrot.lane.b32.xlu0 %v179, 16
        %v199 = vpop.permute.xlu0 %198
        %200 = vrot.lane.b32.xlu0 %v180, 16
        %v201 = vpop.permute.xlu0 %200
        %202 = vrot.lane.b32.xlu0 %v181, 16
        %v203 = vpop.permute.xlu0 %202
        %204 = vrot.lane.b32.xlu0 %v182, 16
        %v205 = vpop.permute.xlu0 %204
        %206 = vrot.lane.b32.xlu0 %v183, 16
        %v207 = vpop.permute.xlu0 %206
        %vm216 = vcmask 261248
        %217 = vst.msk [vmem:[%s154] sm:$0xff] %vm216, %v193
        %218 = vst.msk [vmem:[%s154 + $0x8] sm:$0xff] %vm216, %v195
        %219 = vst.msk [vmem:[%s154 + $0x20] sm:$0xff] %vm216, %v197
        %220 = vst.msk [vmem:[%s154 + $0x28] sm:$0xff] %vm216, %v199
        %221 = vst.msk [vmem:[%s154 + $0x40] sm:$0xff] %vm216, %v201
        %222 = vst.msk [vmem:[%s154 + $0x48] sm:$0xff] %vm216, %v203
        %223 = vst.msk [vmem:[%s154 + $0x60] sm:$0xff] %vm216, %v205
        %224 = vst.msk [vmem:[%s154 + $0x68] sm:$0xff] %vm216, %v207
        %s225 = scalar_lea.vmem %s136, 128 [#allocation2]
        %v226 = vld [vmem:[%s225] sm:$0xff]
        %v227 = vld [vmem:[%s225 + $0x8] sm:$0xff]
        %v228 = vld [vmem:[%s225 + $0x10] sm:$0xff]
        %v229 = vld [vmem:[%s225 + $0x18] sm:$0xff]
        %v230 = vld [vmem:[%s225 + $0x20] sm:$0xff]
        %v231 = vld [vmem:[%s225 + $0x28] sm:$0xff]
        %v232 = vld [vmem:[%s225 + $0x30] sm:$0xff]
        %v233 = vld [vmem:[%s225 + $0x38] sm:$0xff]
        %234 = vst.msk [vmem:[%s154 + $0x10] sm:$0xff] %vm166, %v226
        %235 = vst.msk [vmem:[%s154 + $0x18] sm:$0xff] %vm166, %v227
        %236 = vst.msk [vmem:[%s154 + $0x30] sm:$0xff] %vm166, %v228
        %237 = vst.msk [vmem:[%s154 + $0x38] sm:$0xff] %vm166, %v229
        %238 = vst.msk [vmem:[%s154 + $0x50] sm:$0xff] %vm166, %v230
        %239 = vst.msk [vmem:[%s154 + $0x58] sm:$0xff] %vm166, %v231
        %240 = vst.msk [vmem:[%s154 + $0x70] sm:$0xff] %vm166, %v232
        %241 = vst.msk [vmem:[%s154 + $0x78] sm:$0xff] %vm166, %v233
        %s242 = scalar_lea.vmem %s136, 192 [#allocation2]
        %v243 = vld [vmem:[%s242] sm:$0xff]
        %v244 = vld [vmem:[%s242 + $0x8] sm:$0xff]
        %v245 = vld [vmem:[%s242 + $0x10] sm:$0xff]
        %v246 = vld [vmem:[%s242 + $0x18] sm:$0xff]
        %v247 = vld [vmem:[%s242 + $0x20] sm:$0xff]
        %v248 = vld [vmem:[%s242 + $0x28] sm:$0xff]
        %v249 = vld [vmem:[%s242 + $0x30] sm:$0xff]
        %v250 = vld [vmem:[%s242 + $0x38] sm:$0xff]
        %259 = vrot.lane.b32.xlu0 %v243, 16
        %v260 = vpop.permute.xlu0 %259
        %261 = vrot.lane.b32.xlu0 %v244, 16
        %v262 = vpop.permute.xlu0 %261
        %263 = vrot.lane.b32.xlu0 %v245, 16
        %v264 = vpop.permute.xlu0 %263
        %265 = vrot.lane.b32.xlu0 %v246, 16
        %v266 = vpop.permute.xlu0 %265
        %267 = vrot.lane.b32.xlu0 %v247, 16
        %v268 = vpop.permute.xlu0 %267
        %269 = vrot.lane.b32.xlu0 %v248, 16
        %v270 = vpop.permute.xlu0 %269
        %271 = vrot.lane.b32.xlu0 %v249, 16
        %v272 = vpop.permute.xlu0 %271
        %273 = vrot.lane.b32.xlu0 %v250, 16
        %v274 = vpop.permute.xlu0 %273
        %283 = vst.msk [vmem:[%s154 + $0x10] sm:$0xff] %vm216, %v260
        %284 = vst.msk [vmem:[%s154 + $0x18] sm:$0xff] %vm216, %v262
        %285 = vst.msk [vmem:[%s154 + $0x30] sm:$0xff] %vm216, %v264
        %286 = vst.msk [vmem:[%s154 + $0x38] sm:$0xff] %vm216, %v266
        %287 = vst.msk [vmem:[%s154 + $0x50] sm:$0xff] %vm216, %v268
        %288 = vst.msk [vmem:[%s154 + $0x58] sm:$0xff] %vm216, %v270
        %289 = vst.msk [vmem:[%s154 + $0x70] sm:$0xff] %vm216, %v272
        %290 = vst.msk [vmem:[%s154 + $0x78] sm:$0xff] %vm216, %v274
        %s291 = sand.u32 %s68, 1
        %s292 = scalar_lea.sflag [#allocation4], %s291
        %s293 = sand.u32 %s68, 1
        %s294 = smul.addr %s293, 128
        %s295 = scalar_lea.vmem [#allocation5], %s294
        // Predicated region
        $region29: #{tpu_custom_call.1} parent=23 // pred_check
          %p296 = pneg %p78
        $region30: #{tpu_custom_call.1} parent=23 // pred_check_branch
          %298 = sbr.rel (%p296) target = $region32
        $region31: #{tpu_custom_call.1} parent=23 // pred_region
          %s299 = smul.u32 4, %s23
          %s301 = ssub.s32 2048, 2048
          %302 = vsyncadd %s292, %s301
          %s303 = smul.addr %s299, 4
          %s304 = smul.addr %s22, 16
          %s305 = sadd.s32 %s303, %s304
          %s306 = smul.addr %s305, 128
          %s307 = scalar_lea.hbm %s1, %s306
          %s308 = sshll.u32 %s295, 4
          %s309 = int_to_ptr.vmem [resolvable:$true] %s308
          %314 = dma.vmem_to_hbm [thread:$0]  %s309, 2048, %s307, %s292, 128, 128, 8
        $region32: #{tpu_custom_call.1} parent=23 // pred_fallthru
          _
      $region24: #{tpu_custom_call.1} parent=5 // pred_fallthru
        _
      %p315 = scmp.le.s32.totalorder 2, %s13
      // Predicated region
      $region33: #{tpu_custom_call.1} parent=5 // pred_check
        %p316 = pneg %p315
      $region34: #{tpu_custom_call.1} parent=5 // pred_check_branch
        %318 = sbr.rel (%p316) target = $region36
      $region35: #{tpu_custom_call.1} parent=5 // pred_region
        %s319 = ssub.s32 %s13, 2
        // Predicated region
        $region37: #{tpu_custom_call.1} parent=35 // pred_check
          %p320 = pneg %p84
        $region38: #{tpu_custom_call.1} parent=35 // pred_check_branch
          %322 = sbr.rel (%p320) target = $region40
        $region39: #{tpu_custom_call.1} parent=35 // pred_region
          %s323 = sand.u32 %s69, 1
          %s324 = scalar_lea.sflag [#allocation4], %s323
          %s325 = sand.u32 %s69, 1
          %s326 = smul.addr %s325, 128
          %s327 = scalar_lea.vmem [#allocation5], %s326
          %328 = dma.done %s324, 2048
        $region40: #{tpu_custom_call.1} parent=35 // pred_fallthru
          _
      $region36: #{tpu_custom_call.1} parent=5 // pred_fallthru
        _
    $region6: #{tpu_custom_call.1} parent=1 // loop_footer
      %s17 = sadd.s32 1, %s13
    $region7: #{tpu_custom_call.1} parent=1 // loop_footer_branch
      %12 = sbr.rel target = $region3
    $region8: #{tpu_custom_call.1} parent=1 // loop_exit
      _
    %329 = vsyncpa [#allocation3], 1
    %s330 = scalar_lea.sflag [#allocation3], 1
    %331 = vsyncpa %s330, 1
    %332 = vsyncpa [#allocation4], 1
    %s333 = scalar_lea.sflag [#allocation4], 1
    %334 = vsyncpa %s333, 1

</llo_original>
